<compile_context>
chip_gen: v7x
topology: tpu7x:2x2x1
jax: 0.10.0
libtpu: 0.0.40
codegen_flags: <defaults>
</compile_context>

<pallas_src>
import functools
import math

import jax
import jax.numpy as jnp
from jax.experimental import pallas as pl
from jax.experimental.pallas import tpu as pltpu


def _round_up(x, m):
    return (x + m - 1) // m * m


def _vmem_capacity_bytes():
    try:
        return int(pltpu.get_tpu_info().vmem_capacity_bytes)
    except Exception:
        return 64 * 1024 * 1024  # conservative (v7x-safe) fallback


def _gelu_compute_dtype():
    # bf16 VALU exists on v6e/v7x; v5e has none -> keep GELU math in f32 there.
    try:
        kind = jax.devices()[0].device_kind.lower()
    except Exception:
        kind = ""
    return jnp.float32 if "v5" in kind else jnp.bfloat16


def _gelu_tanh(x):
    # tanh-approx GELU: tanh goes to the EUP slot instead of a long erf VPU polynomial.
    c = 0.7978845608028654  # sqrt(2/pi)
    return 0.5 * x * (1.0 + jnp.tanh(c * (x + 0.044715 * x * x * x)))


def _ff_kernel(x_ref, w1_ref, b1_ref, w2_ref, b2_ref, o_ref, xn_ref, *, gelu_dtype):
    # Grid: (row_blocks, hidden_blocks). Hidden axis is the (inner) reduction axis.
    h_step = pl.program_id(1)

    @pl.when(h_step == 0)
    def _():
        # LayerNorm (torch default eps=1e-5) over the last dim, once per row block.
        # The LN affine (weight/bias) is already folded into w1/b1 in the wrapper.
        x = x_ref[...].astype(jnp.float32)
        mu = jnp.mean(x, axis=-1, keepdims=True)
        var = jnp.mean((x - mu) * (x - mu), axis=-1, keepdims=True)
        xn = (x - mu) * jax.lax.rsqrt(var + 1e-5)
        xn_ref[...] = xn.astype(jnp.bfloat16)       # bf16 MXU operand, reused across H tiles
        # Initialize the (VMEM-resident) output with residual + final bias; matmul-2
        # partial sums accumulate on top across hidden steps.
        o_ref[...] = x + b2_ref[...]

    # Linear 1 slice on the MXU: (TM, D) @ (D, TH) -> (TM, TH), f32 accumulation.
    h = jnp.dot(xn_ref[...], w1_ref[...], preferred_element_type=jnp.float32)
    h = h + b1_ref[...]

    # GELU (tanh approx; see header note on the tiny deviation vs exact erf).
    h = _gelu_tanh(h.astype(gelu_dtype))

    # Dropout(p=0.0) is identity at inference -> omitted.
    # Linear 2 partial contribution, accumulated directly into the resident output block.
    o_ref[...] += jnp.dot(h.astype(jnp.bfloat16), w2_ref[...],
                          preferred_element_type=jnp.float32)


def prepare_ffn_params(ln_w, ln_b, w1, b1, w2, b2, *, block_h=None):
    """One-time parameter prep (call at load time, NOT per forward call):
    fold the LayerNorm affine into Linear-1, pad the hidden dim, cast weights to bf16."""
    D, H = w1.shape
    Dout = w2.shape[1]
    if block_h is None:
        # 128 granularity (lane width); cap bounds weight-tile VMEM residency at large H.
        block_h = min(_round_up(H, 128), 2048)
    th = block_h
    h_pad = _round_up(H, th)

    ln_w = ln_w.reshape(-1).astype(jnp.float32)
    ln_b = ln_b.reshape(-1).astype(jnp.float32)
    # (xn * ln_w + ln_b) @ w1 + b1  ==  xn @ (ln_w[:,None] * w1) + (b1 + ln_b @ w1)
    w1f = w1.astype(jnp.float32) * ln_w[:, None]
    b1f = b1.reshape(1, -1).astype(jnp.float32) + ln_b.reshape(1, -1) @ w1.astype(jnp.float32)
    w2f = w2.astype(jnp.float32)

    if h_pad != H:
        # Exact: padded b1 columns are 0 and gelu(0) == 0 -> no contribution to matmul 2.
        w1f = jnp.pad(w1f, ((0, 0), (0, h_pad - H)))
        b1f = jnp.pad(b1f, ((0, 0), (0, h_pad - H)))
        w2f = jnp.pad(w2f, ((0, h_pad - H), (0, 0)))

    return dict(
        w1=w1f.astype(jnp.bfloat16),            # (D, h_pad)   bf16 MXU operand
        b1=b1f,                                  # (1, h_pad)   f32
        w2=w2f.astype(jnp.bfloat16),            # (h_pad, Dout) bf16 MXU operand
        b2=b2.reshape(1, -1).astype(jnp.float32),  # (1, Dout)  f32
        block_h=th,
    )


def feed_forward(x, params, *, block_rows=None):
    B, S, D = x.shape
    w1, b1, w2, b2 = params["w1"], params["b1"], params["w2"], params["b2"]
    th = params["block_h"]
    H_pad = w1.shape[1]
    Dout = w2.shape[1]
    assert Dout == D, "out_dim == dim -> residual is Identity"
    N = B * S

    # ---- Generation-aware budgets.
    cap = _vmem_capacity_bytes()
    vmem_limit = int(cap * 3 // 4)              # ~96 MiB on v5e/v6e, ~48 MiB on v7x
    if block_rows is None:
        block_rows = 512 if cap >= 96 * 1024 * 1024 else 256
    gelu_dtype = _gelu_compute_dtype()

    # ---- Row tiling (parallel axis). Multiple of 8 (f32 sublanes), zero padded.
    n_min = _round_up(N, 8)
    tm = min(block_rows, n_min)
    # v7x has 2 TensorCores: give the "parallel" row axis >= 2 blocks whenever N allows.
    if n_min >= 16 and pl.cdiv(n_min, tm) < 2:
        tm = _round_up(pl.cdiv(n_min, 2), 8)

    # Shrink the row tile if the per-step VMEM footprint would blow the budget.
    def _footprint(tm_):
        return (2 * tm_ * D * 4                 # x tile (double-buffered)
                + 2 * D * th * 2                # w1 tiles
                + 2 * 8 * th * 4                # b1 tiles (sublane-padded)
                + 2 * th * Dout * 2             # w2 tiles
                + 8 * Dout * 4                  # b2 (single-buffered)
                + 2 * tm_ * Dout * 4            # output tile (double-buffered)
                + tm_ * D * 2                   # xn scratch
                + tm_ * th * (4 + 2))           # f32 + bf16 GELU temporaries
    while tm > 64 and _footprint(tm) > int(0.8 * vmem_limit):
        tm = _round_up(tm // 2, 8)

    n_pad = _round_up(N, tm)
    xf = x.reshape(N, D)
    if n_pad != N:
        xf = jnp.pad(xf, ((0, n_pad - N), (0, 0)))

    grid = (n_pad // tm, H_pad // th)

    cost = pl.CostEstimate(
        flops=2 * N * D * H_pad + 2 * N * H_pad * Dout,
        transcendentals=N * H_pad,
        bytes_accessed=(xf.size * 4 + w1.size * 2 + w2.size * 2
                        + b1.size * 4 + b2.size * 4 + n_pad * Dout * 4),
    )

    kernel = functools.partial(_ff_kernel, gelu_dtype=gelu_dtype)

    out = pl.pallas_call(
        kernel,
        out_shape=jax.ShapeDtypeStruct((n_pad, Dout), jnp.float32),
        grid_spec=pltpu.PrefetchScalarGridSpec(
            num_scalar_prefetch=0,
            grid=grid,
            in_specs=[
                pl.BlockSpec((tm, D), lambda i, h: (i, 0)),        # x rows (resident over h)
                pl.BlockSpec((D, th), lambda i, h: (0, h)),        # w1 column tile
                pl.BlockSpec((1, th), lambda i, h: (0, h)),        # b1 tile
                pl.BlockSpec((th, Dout), lambda i, h: (h, 0)),     # w2 row tile
                pl.BlockSpec((1, Dout), lambda i, h: (0, 0),
                             pipeline_mode=pl.Buffered(1)),        # b2 (constant)
            ],
            out_specs=pl.BlockSpec((tm, Dout), lambda i, h: (i, 0)),
            scratch_shapes=[
                pltpu.VMEM((tm, D), jnp.bfloat16),   # layer-normed activations (reused over H)
            ],
        ),
        compiler_params=pltpu.CompilerParams(
            dimension_semantics=("parallel", "arbitrary"),
            vmem_limit_bytes=vmem_limit,
        ),
        cost_estimate=cost,
    )(xf, w1, b1, w2, b2)

    out = out[:N].reshape(B, S, Dout)
    if x.dtype != jnp.float32:
        out = out.astype(x.dtype)
    return out


def _reference(x, ln_w, ln_b, w1, b1, w2, b2):
    # Pure-f32 reference matching the torch module (exact-erf GELU).
    mu = jnp.mean(x, axis=-1, keepdims=True)
    var = jnp.mean((x - mu) ** 2, axis=-1, keepdims=True)
    xn = (x - mu) * jax.lax.rsqrt(var + 1e-5)
    xn = xn * ln_w[0] + ln_b[0]
    h = xn @ w1 + b1[0]
    h = 0.5 * h * (1.0 + jax.lax.erf(h / jnp.sqrt(2.0)))
    y = h @ w2 + b2[0]
    return y + x


if __name__ == "__main__":
    # Module config: dim=32, hidden_dim=128, out_dim=None -> out_dim=dim, drop_out=0.0,
    # activation='gelu', residual = Identity.
    B, S, D, H = 2, 8, 32, 128

    key = jax.random.PRNGKey(0)
    kx, k1, k2, k3, k4 = jax.random.split(key, 5)

    x = jax.random.normal(kx, (B, S, D), dtype=jnp.float32)

    # Deterministic parameter init (torch LayerNorm default: weight=1, bias=0).
    ln_w = jnp.ones((1, D), dtype=jnp.float32)
    ln_b = jnp.zeros((1, D), dtype=jnp.float32)
    w1 = jax.random.normal(k1, (D, H), dtype=jnp.float32) * (1.0 / math.sqrt(D))
    b1 = jax.random.normal(k2, (1, H), dtype=jnp.float32) * 0.01
    w2 = jax.random.normal(k3, (H, D), dtype=jnp.float32) * (1.0 / math.sqrt(H))
    b2 = jax.random.normal(k4, (1, D), dtype=jnp.float32) * 0.01

    # One-time param prep (LN-affine fold + hidden padding + bf16 cast).
    params = prepare_ffn_params(ln_w, ln_b, w1, b1, w2, b2)

    out = feed_forward(x, params)
    out = jax.block_until_ready(out)

    ref = _reference(x, ln_w, ln_b, w1, b1, w2, b2)
    assert out.shape == (B, S, D)
    # bf16 MXU operands + tanh-approx GELU -> small deviation from the pure-f32 erf reference.
    assert jnp.allclose(out, ref, atol=5e-2, rtol=5e-2)

    print("KERNEL_OK")
</pallas_src>

<mosaic_0001>
module attributes {stable_mosaic.version = 11 : i64} {
  func.func @_ff_kernel(%arg0: i32, %arg1: i32, %arg2: memref<8x32xf32, #tpu.memory_space<vmem>>, %arg3: memref<32x128xbf16, #tpu.memory_space<vmem>>, %arg4: memref<1x128xf32, #tpu.memory_space<vmem>>, %arg5: memref<128x32xbf16, #tpu.memory_space<vmem>>, %arg6: memref<1x32xf32, #tpu.memory_space<vmem>>, %arg7: memref<8x32xf32, #tpu.memory_space<vmem>>, %arg8: memref<8x32xbf16, #tpu.memory_space<vmem>>) attributes {dimension_semantics = [#tpu.dimension_semantics<parallel>, #tpu.dimension_semantics<arbitrary>], iteration_bounds = array<i64: 2, 1>, scalar_prefetch = 0 : i64, scratch_operands = 1 : i64, tpu.core_type = #tpu.core_type<tc>, window_params = [{transform_indices = @transform_0, window_bounds = array<i64: 8, 32>}, {transform_indices = @transform_1, window_bounds = array<i64: 32, 128>}, {transform_indices = @transform_2, window_bounds = array<i64: 1, 128>}, {transform_indices = @transform_3, window_bounds = array<i64: 128, 32>}, {pipeline_mode = #tpu.pipeline_mode<synchronous>, transform_indices = @transform_4, window_bounds = array<i64: 1, 32>}, {transform_indices = @transform_5, window_bounds = array<i64: 8, 32>}]} {
    %c0_i32 = arith.constant 0 : i32
    %0 = arith.cmpi eq, %arg1, %c0_i32 : i32
    %1 = arith.extui %0 : i1 to i32
    %c0_i32_0 = arith.constant 0 : i32
    %2 = arith.cmpi ne, %1, %c0_i32_0 : i32
    scf.if %2 {
      %c0_17 = arith.constant 0 : index
      %c0_18 = arith.constant 0 : index
      %28 = vector.load %arg2[%c0_17, %c0_18] : memref<8x32xf32, #tpu.memory_space<vmem>>, vector<8x32xf32>
      %cst_19 = arith.constant dense<0.000000e+00> : vector<8xf32>
      %29 = vector.multi_reduction <add>, %28, %cst_19 [1] : vector<8x32xf32> to vector<8xf32>
      %30 = vector.shape_cast %29 : vector<8xf32> to vector<8x1xf32>
      %cst_20 = arith.constant 3.200000e+01 : f32
      %31 = vector.broadcast %cst_20 : f32 to vector<8x1xf32>
      %32 = arith.divf %30, %31 : vector<8x1xf32>
      %33 = vector.broadcast %32 : vector<8x1xf32> to vector<8x32xf32>
      %34 = arith.subf %28, %33 : vector<8x32xf32>
      %35 = vector.broadcast %32 : vector<8x1xf32> to vector<8x32xf32>
      %36 = arith.subf %28, %35 : vector<8x32xf32>
      %37 = arith.mulf %34, %36 : vector<8x32xf32>
      %cst_21 = arith.constant dense<0.000000e+00> : vector<8xf32>
      %38 = vector.multi_reduction <add>, %37, %cst_21 [1] : vector<8x32xf32> to vector<8xf32>
      %39 = vector.shape_cast %38 : vector<8xf32> to vector<8x1xf32>
      %cst_22 = arith.constant 3.200000e+01 : f32
      %40 = vector.broadcast %cst_22 : f32 to vector<8x1xf32>
      %41 = arith.divf %39, %40 : vector<8x1xf32>
      %42 = vector.broadcast %32 : vector<8x1xf32> to vector<8x32xf32>
      %43 = arith.subf %28, %42 : vector<8x32xf32>
      %cst_23 = arith.constant 9.99999974E-6 : f32
      %44 = vector.broadcast %cst_23 : f32 to vector<8x1xf32>
      %45 = arith.addf %41, %44 : vector<8x1xf32>
      %46 = math.rsqrt %45 : vector<8x1xf32>
      %47 = vector.broadcast %46 : vector<8x1xf32> to vector<8x32xf32>
      %48 = arith.mulf %43, %47 : vector<8x32xf32>
      %49 = arith.truncf %48 : vector<8x32xf32> to vector<8x32xbf16>
      %c0_24 = arith.constant 0 : index
      %c0_25 = arith.constant 0 : index
      %50 = vector.load %arg8[%c0_24, %c0_25] : memref<8x32xbf16, #tpu.memory_space<vmem>>, vector<8x32xbf16>
      tpu.vector_store %arg8[%c0_24, %c0_25], %49 {strides = array<i32>} : memref<8x32xbf16, #tpu.memory_space<vmem>>, vector<8x32xbf16>,
      %c0_26 = arith.constant 0 : index
      %c0_27 = arith.constant 0 : index
      %51 = vector.load %arg6[%c0_26, %c0_27] : memref<1x32xf32, #tpu.memory_space<vmem>>, vector<1x32xf32>
      %52 = vector.broadcast %51 : vector<1x32xf32> to vector<8x32xf32>
      %53 = arith.addf %28, %52 : vector<8x32xf32>
      %c0_28 = arith.constant 0 : index
      %c0_29 = arith.constant 0 : index
      %54 = vector.load %arg7[%c0_28, %c0_29] : memref<8x32xf32, #tpu.memory_space<vmem>>, vector<8x32xf32>
      tpu.vector_store %arg7[%c0_28, %c0_29], %53 {strides = array<i32>} : memref<8x32xf32, #tpu.memory_space<vmem>>, vector<8x32xf32>,
    } else {
    }
    %c0 = arith.constant 0 : index
    %c0_1 = arith.constant 0 : index
    %3 = vector.load %arg8[%c0, %c0_1] : memref<8x32xbf16, #tpu.memory_space<vmem>>, vector<8x32xbf16>
    %c0_2 = arith.constant 0 : index
    %c0_3 = arith.constant 0 : index
    %4 = vector.load %arg3[%c0_2, %c0_3] : memref<32x128xbf16, #tpu.memory_space<vmem>>, vector<32x128xbf16>
    %cst = arith.constant dense<0.000000e+00> : vector<8x128xf32>
    %5 = tpu.matmul %3, %4, %cst {dimension_numbers = #tpu.dot_dimension_numbers<[1], [0], [0], [1], [0, 0, 1, 1], [], []>} : vector<8x32xbf16>, vector<32x128xbf16>, vector<8x128xf32> -> vector<8x128xf32>
    %c0_4 = arith.constant 0 : index
    %c0_5 = arith.constant 0 : index
    %6 = vector.load %arg4[%c0_4, %c0_5] : memref<1x128xf32, #tpu.memory_space<vmem>>, vector<1x128xf32>
    %7 = vector.broadcast %6 : vector<1x128xf32> to vector<8x128xf32>
    %8 = arith.addf %5, %7 : vector<8x128xf32>
    %9 = arith.truncf %8 : vector<8x128xf32> to vector<8x128xbf16>
    %cst_6 = arith.constant 5.000000e-01 : bf16
    %10 = vector.broadcast %cst_6 : bf16 to vector<8x128xbf16>
    %11 = arith.mulf %10, %9 : vector<8x128xbf16>
    %cst_7 = arith.constant 4.467770e-02 : bf16
    %12 = vector.broadcast %cst_7 : bf16 to vector<8x128xbf16>
    %13 = arith.mulf %12, %9 : vector<8x128xbf16>
    %14 = arith.mulf %13, %9 : vector<8x128xbf16>
    %15 = arith.mulf %14, %9 : vector<8x128xbf16>
    %16 = arith.addf %9, %15 : vector<8x128xbf16>
    %cst_8 = arith.constant 7.968750e-01 : bf16
    %17 = vector.broadcast %cst_8 : bf16 to vector<8x128xbf16>
    %18 = arith.mulf %17, %16 : vector<8x128xbf16>
    %19 = math.tanh %18 : vector<8x128xbf16>
    %cst_9 = arith.constant 1.000000e+00 : bf16
    %20 = vector.broadcast %cst_9 : bf16 to vector<8x128xbf16>
    %21 = arith.addf %20, %19 : vector<8x128xbf16>
    %22 = arith.mulf %11, %21 : vector<8x128xbf16>
    %c0_10 = arith.constant 0 : index
    %c0_11 = arith.constant 0 : index
    %23 = vector.load %arg7[%c0_10, %c0_11] : memref<8x32xf32, #tpu.memory_space<vmem>>, vector<8x32xf32>
    %c0_12 = arith.constant 0 : index
    %c0_13 = arith.constant 0 : index
    %24 = vector.load %arg5[%c0_12, %c0_13] : memref<128x32xbf16, #tpu.memory_space<vmem>>, vector<128x32xbf16>
    %cst_14 = arith.constant dense<0.000000e+00> : vector<8x32xf32>
    %25 = tpu.matmul %22, %24, %cst_14 {dimension_numbers = #tpu.dot_dimension_numbers<[1], [0], [0], [1], [0, 0, 1, 1], [], []>} : vector<8x128xbf16>, vector<128x32xbf16>, vector<8x32xf32> -> vector<8x32xf32>
    %26 = arith.addf %23, %25 : vector<8x32xf32>
    %c0_15 = arith.constant 0 : index
    %c0_16 = arith.constant 0 : index
    %27 = vector.load %arg7[%c0_15, %c0_16] : memref<8x32xf32, #tpu.memory_space<vmem>>, vector<8x32xf32>
    tpu.vector_store %arg7[%c0_15, %c0_16], %26 {strides = array<i32>} : memref<8x32xf32, #tpu.memory_space<vmem>>, vector<8x32xf32>,
    return
  }
  func.func @transform_0(%arg0: i32, %arg1: i32) -> (i32, i32) {
    %c0_i32 = arith.constant 0 : i32
    %c0_i32_0 = arith.constant 0 : i32
    return %arg0, %c0_i32 : i32, i32
  }
  func.func @transform_1(%arg0: i32, %arg1: i32) -> (i32, i32) {
    %c0_i32 = arith.constant 0 : i32
    %c0_i32_0 = arith.constant 0 : i32
    return %c0_i32, %arg1 : i32, i32
  }
  func.func @transform_2(%arg0: i32, %arg1: i32) -> (i32, i32) {
    %c0_i32 = arith.constant 0 : i32
    %c0_i32_0 = arith.constant 0 : i32
    return %c0_i32, %arg1 : i32, i32
  }
  func.func @transform_3(%arg0: i32, %arg1: i32) -> (i32, i32) {
    %c0_i32 = arith.constant 0 : i32
    %c0_i32_0 = arith.constant 0 : i32
    return %arg1, %c0_i32 : i32, i32
  }
  func.func @transform_4(%arg0: i32, %arg1: i32) -> (i32, i32) {
    %c0_i32 = arith.constant 0 : i32
    %c0_i32_0 = arith.constant 0 : i32
    %c0_i32_1 = arith.constant 0 : i32
    return %c0_i32, %c0_i32_0 : i32, i32
  }
  func.func @transform_5(%arg0: i32, %arg1: i32) -> (i32, i32) {
    %c0_i32 = arith.constant 0 : i32
    %c0_i32_0 = arith.constant 0 : i32
    return %arg0, %c0_i32 : i32, i32
  }
}

</mosaic_0001>

<llo_original>
// kernel: tpu_custom_call.1
$region0: #{tpu_custom_call.1}
  #allocation0 [shape = 'u32[]', space=smem, size = 0x4, offset = 0x4, fixed_abs, tag = 'smem constant byte address 0x4 - core index']
  #allocation1 [shape = 'u32[144,128]{1,0:T(1,128)}', space=vmem, size = 0x12000, scoped, tag = 'internal scratch']
  #allocation2 [shape = 'bf16[8,32]{1,0:T(8,128)(2,1)}', space=vmem, size = 0x800, scoped, tag = 'scratch operand']
  %s0 = inlined_call_operand.vmem [shape: f32[16,32], index: 0, kind: input, shape index: {}]
  %s1 = inlined_call_operand.vmem [shape: bf16[32,128], index: 1, kind: input, shape index: {}]
  %s2 = inlined_call_operand.vmem [shape: f32[1,128], index: 2, kind: input, shape index: {}]
  %s3 = inlined_call_operand.vmem [shape: bf16[128,32], index: 3, kind: input, shape index: {}]
  %s4 = inlined_call_operand.vmem [shape: f32[1,32], index: 4, kind: input, shape index: {}]
  %s5 = inlined_call_operand.hbm [shape: f32[16,32], index: 5, kind: output, shape index: {}]
  %s6 = sld [smem:[#allocation0]]
  $region57: #{tpu_custom_call.1} parent=0
    _
  %s8 = ssub.s32 1, %s6
  %s9 = scalar_select 0, %s8, %s6
  $region1: #{tpu_custom_call.1} parent=0
    #allocation3 [shape = 'u8[8192]{0}', space=vmem, size = 0x2000, scoped, tag = 'output window, operand 0']
    #allocation4 [shape = 's32[2]{0}', space=sflag, size = 0x8, scoped, tag = 'scoped memory for tpu_custom_call.1']
    %10 = vsyncpa [#allocation4], 0
    %s11 = scalar_lea.sflag [#allocation4], 1
    %12 = vsyncpa %s11, 0
    loop: start=0, step=1, limit=4
    $region2: #{tpu_custom_call.1} parent=1 // loop_pre_header
      _
    $region3: #{tpu_custom_call.1} parent=1 // loop_header
      %s14 = sphi 0, %s18
      %p15 = scmp.ge.s32.totalorder %s14, 4
      %s21 = sphi 0, %s33
      %s22 = sphi 0, %s29
      %s23 = sphi 0, %s21
      %s24 = sphi 0, %s22
      %s25 = sphi 0, %s23
      %s26 = sphi 0, %s24
      %s36 = sphi 0, %s38
      %s39 = sphi 0, %s36
      %s40 = sphi 0, %s39
      %s56 = sphi 0, %s40
      %s62 = sphi 0, %s64
      %s65 = sphi 0, %s62
      %s66 = sphi 0, %s65
      %s82 = sphi 0, %s66
      %s88 = sphi 0, %s90
      %s91 = sphi 0, %s88
      %s92 = sphi 0, %s91
      %s108 = sphi 0, %s92
      %s114 = sphi 0, %s116
      %s117 = sphi 0, %s114
      %s118 = sphi 0, %s117
      %s134 = sphi 0, %s118
      %s138 = sphi 0, %s138
      %s140 = sphi 0, %s138
      %s141 = sphi 0, %s140
      %s155 = sphi 0, %s141
      %s161 = sphi 0, %s163
      %s164 = sphi 0, %s161
      %s165 = sphi 0, %s164
      %s181 = sphi 0, %s165
    $region4: #{tpu_custom_call.1} parent=1 // loop_header_branch
      %17 = sbr.rel (%p15) target = $region8
    $region5: #{tpu_custom_call.1} parent=1 // loop_body
      %s19 = ssub.s32 %s14, 1
      %s20 = ssub.s32 %s14, 2
      %s27 = sadd.s32 1, %s22
      %p28 = scmp.ge.s32.totalorder %s27, 1
      %s29 = scalar_select %p28, 0, %s27
      %s30 = sadd.s32 1, %s21
      %s31 = scalar_select %p28, %s30, %s21
      %p32 = scmp.ge.s32.totalorder %s31, 2
      %s33 = scalar_select %p32, 0, %s31
      %s34 = ssub.s32 %s21, %s33
      %p35 = scmp.eq.s32.totalorder %s34, 0
      %s37 = sadd.s32 %s36, 1
      %s38 = scalar_select %p35, %s36, %s37
      %p41 = pneg %p35
      %p42 = scmp.eq.s32.totalorder %s14, 1
      %p43 = por %p41, %p42
      %p44 = scmp.ne.s32.totalorder %s36, %s39
      %p45 = scmp.eq.s32.totalorder %s14, 0
      %p46 = por %p44, %p45
      %p47 = scmp.ne.s32.totalorder %s36, %s39
      %p48 = scmp.eq.s32.totalorder %s19, 1
      %p49 = por %p47, %p48
      %p50 = scmp.ne.s32.totalorder %s39, %s40
      %p51 = scmp.eq.s32.totalorder %s19, 0
      %p52 = por %p50, %p51
      %p53 = scmp.ne.s32.totalorder %s39, %s40
      %p54 = scmp.eq.s32.totalorder %s20, 1
      %p55 = por %p53, %p54
      %p57 = scmp.ne.s32.totalorder %s40, %s56
      %p58 = scmp.eq.s32.totalorder %s20, 0
      %p59 = por %p57, %p58
      %s60 = ssub.s32 %s22, %s29
      %p61 = scmp.eq.s32.totalorder %s60, 0
      %s63 = sadd.s32 %s62, 1
      %s64 = scalar_select %p61, %s62, %s63
      %p67 = pneg %p61
      %p68 = scmp.eq.s32.totalorder %s14, 1
      %p69 = por %p67, %p68
      %p70 = scmp.ne.s32.totalorder %s62, %s65
      %p71 = scmp.eq.s32.totalorder %s14, 0
      %p72 = por %p70, %p71
      %p73 = scmp.ne.s32.totalorder %s62, %s65
      %p74 = scmp.eq.s32.totalorder %s19, 1
      %p75 = por %p73, %p74
      %p76 = scmp.ne.s32.totalorder %s65, %s66
      %p77 = scmp.eq.s32.totalorder %s19, 0
      %p78 = por %p76, %p77
      %p79 = scmp.ne.s32.totalorder %s65, %s66
      %p80 = scmp.eq.s32.totalorder %s20, 1
      %p81 = por %p79, %p80
      %p83 = scmp.ne.s32.totalorder %s66, %s82
      %p84 = scmp.eq.s32.totalorder %s20, 0
      %p85 = por %p83, %p84
      %s86 = ssub.s32 %s22, %s29
      %p87 = scmp.eq.s32.totalorder %s86, 0
      %s89 = sadd.s32 %s88, 1
      %s90 = scalar_select %p87, %s88, %s89
      %p93 = pneg %p87
      %p94 = scmp.eq.s32.totalorder %s14, 1
      %p95 = por %p93, %p94
      %p96 = scmp.ne.s32.totalorder %s88, %s91
      %p97 = scmp.eq.s32.totalorder %s14, 0
      %p98 = por %p96, %p97
      %p99 = scmp.ne.s32.totalorder %s88, %s91
      %p100 = scmp.eq.s32.totalorder %s19, 1
      %p101 = por %p99, %p100
      %p102 = scmp.ne.s32.totalorder %s91, %s92
      %p103 = scmp.eq.s32.totalorder %s19, 0
      %p104 = por %p102, %p103
      %p105 = scmp.ne.s32.totalorder %s91, %s92
      %p106 = scmp.eq.s32.totalorder %s20, 1
      %p107 = por %p105, %p106
      %p109 = scmp.ne.s32.totalorder %s92, %s108
      %p110 = scmp.eq.s32.totalorder %s20, 0
      %p111 = por %p109, %p110
      %s112 = ssub.s32 %s22, %s29
      %p113 = scmp.eq.s32.totalorder %s112, 0
      %s115 = sadd.s32 %s114, 1
      %s116 = scalar_select %p113, %s114, %s115
      %p119 = pneg %p113
      %p120 = scmp.eq.s32.totalorder %s14, 1
      %p121 = por %p119, %p120
      %p122 = scmp.ne.s32.totalorder %s114, %s117
      %p123 = scmp.eq.s32.totalorder %s14, 0
      %p124 = por %p122, %p123
      %p125 = scmp.ne.s32.totalorder %s114, %s117
      %p126 = scmp.eq.s32.totalorder %s19, 1
      %p127 = por %p125, %p126
      %p128 = scmp.ne.s32.totalorder %s117, %s118
      %p129 = scmp.eq.s32.totalorder %s19, 0
      %p130 = por %p128, %p129
      %p131 = scmp.ne.s32.totalorder %s117, %s118
      %p132 = scmp.eq.s32.totalorder %s20, 1
      %p133 = por %p131, %p132
      %p135 = scmp.ne.s32.totalorder %s118, %s134
      %p136 = scmp.eq.s32.totalorder %s20, 0
      %p137 = por %p135, %p136
      %s139 = sadd.s32 %s138, 1
      %p142 = scmp.eq.s32.totalorder %s14, 1
      %p143 = scmp.ne.s32.totalorder %s138, %s140
      %p144 = scmp.eq.s32.totalorder %s14, 0
      %p145 = por %p143, %p144
      %p146 = scmp.ne.s32.totalorder %s138, %s140
      %p147 = scmp.eq.s32.totalorder %s19, 1
      %p148 = por %p146, %p147
      %p149 = scmp.ne.s32.totalorder %s140, %s141
      %p150 = scmp.eq.s32.totalorder %s19, 0
      %p151 = por %p149, %p150
      %p152 = scmp.ne.s32.totalorder %s140, %s141
      %p153 = scmp.eq.s32.totalorder %s20, 1
      %p154 = por %p152, %p153
      %p156 = scmp.ne.s32.totalorder %s141, %s155
      %p157 = scmp.eq.s32.totalorder %s20, 0
      %p158 = por %p156, %p157
      %s159 = ssub.s32 %s21, %s33
      %p160 = scmp.eq.s32.totalorder %s159, 0
      %s162 = sadd.s32 %s161, 1
      %s163 = scalar_select %p160, %s161, %s162
      %p166 = pneg %p160
      %p167 = scmp.eq.s32.totalorder %s14, 1
      %p168 = por %p166, %p167
      %p169 = scmp.ne.s32.totalorder %s161, %s164
      %p170 = scmp.eq.s32.totalorder %s14, 0
      %p171 = por %p169, %p170
      %p172 = scmp.ne.s32.totalorder %s161, %s164
      %p173 = scmp.eq.s32.totalorder %s19, 1
      %p174 = por %p172, %p173
      %p175 = scmp.ne.s32.totalorder %s164, %s165
      %p176 = scmp.eq.s32.totalorder %s19, 0
      %p177 = por %p175, %p176
      %p178 = scmp.ne.s32.totalorder %s164, %s165
      %p179 = scmp.eq.s32.totalorder %s20, 1
      %p180 = por %p178, %p179
      %p182 = scmp.ne.s32.totalorder %s165, %s181
      %p183 = scmp.eq.s32.totalorder %s20, 0
      %p184 = por %p182, %p183
      %p185 = scmp.le.s32.totalorder 1, %s14
      %p186 = scmp.lt.s32.totalorder %s14, 3
      %p187 = pnand %p185, %p186
      %p188 = pneg %p187
      // Predicated region
      $region9: #{tpu_custom_call.1} parent=5 // pred_check
        _
      $region10: #{tpu_custom_call.1} parent=5 // pred_check_branch
        %190 = sbr.rel (%p187) target = $region12
      $region11: #{tpu_custom_call.1} parent=5 // pred_region
        %s191 = ssub.s32 %s14, 1
        // Predicated region
        $region13: #{tpu_custom_call.1} parent=11 // pred_check
          %p192 = pneg %p78
        $region14: #{tpu_custom_call.1} parent=11 // pred_check_branch
          %194 = sbr.rel (%p192) target = $region16
        $region15: #{tpu_custom_call.1} parent=11 // pred_region
          %p195 = scmp.lt.s32.totalorder %s24, 0
          %s196 = scalar_select %p195, %s24, 0
          %s197 = smul.addr %s196, 4
          %s198 = scalar_lea.vmem %s1, %s197
        $region16: #{tpu_custom_call.1} parent=11 // pred_fallthru
          _
        // Predicated region
        $region17: #{tpu_custom_call.1} parent=11 // pred_check
          %p199 = pneg %p104
        $region18: #{tpu_custom_call.1} parent=11 // pred_check_branch
          %201 = sbr.rel (%p199) target = $region20
        $region19: #{tpu_custom_call.1} parent=11 // pred_region
          %p202 = scmp.lt.s32.totalorder %s24, 0
          %s203 = scalar_select %p202, %s24, 0
          %s204 = scalar_lea.vmem %s2, %s203
        $region20: #{tpu_custom_call.1} parent=11 // pred_fallthru
          _
        // Predicated region
        $region21: #{tpu_custom_call.1} parent=11 // pred_check
          %p205 = pneg %p130
        $region22: #{tpu_custom_call.1} parent=11 // pred_check_branch
          %207 = sbr.rel (%p205) target = $region24
        $region23: #{tpu_custom_call.1} parent=11 // pred_region
          %s208 = smul.u32 16, %s24
          %p209 = scmp.lt.s32.totalorder %s208, 15
          %s210 = scalar_select %p209, %s208, 15
          %s211 = smul.addr %s210, 4
          %s212 = scalar_lea.vmem %s3, %s211
          %s213 = smul.u32 16, %s24
        $region24: #{tpu_custom_call.1} parent=11 // pred_fallthru
          _
        // Predicated region
        $region25: #{tpu_custom_call.1} parent=11 // pred_check
          %p214 = pneg %p151
        $region26: #{tpu_custom_call.1} parent=11 // pred_check_branch
          %216 = sbr.rel (%p214) target = $region28
        $region27: #{tpu_custom_call.1} parent=11 // pred_region
          _
        $region28: #{tpu_custom_call.1} parent=11 // pred_fallthru
          _
      $region12: #{tpu_custom_call.1} parent=5 // pred_fallthru
        _
      %p217 = scmp.lt.s32.totalorder %s14, 2
      // Predicated region
      $region29: #{tpu_custom_call.1} parent=5 // pred_check
        %p218 = pneg %p217
      $region30: #{tpu_custom_call.1} parent=5 // pred_check_branch
        %220 = sbr.rel (%p218) target = $region32
      $region31: #{tpu_custom_call.1} parent=5 // pred_region
        // Predicated region
        $region33: #{tpu_custom_call.1} parent=31 // pred_check
          %p221 = pneg %p46
        $region34: #{tpu_custom_call.1} parent=31 // pred_check_branch
          %223 = sbr.rel (%p221) target = $region36
        $region35: #{tpu_custom_call.1} parent=31 // pred_region
          %p224 = scmp.lt.s32.totalorder %s21, 1
          %s225 = scalar_select %p224, %s21, 1
          %s226 = smul.addr %s225, 8
          %s227 = scalar_lea.vmem %s0, %s226
        $region36: #{tpu_custom_call.1} parent=31 // pred_fallthru
          _
      $region32: #{tpu_custom_call.1} parent=5 // pred_fallthru
        _
      %p228 = scmp.le.s32.totalorder 1, %s14
      %p229 = scmp.lt.s32.totalorder %s14, 3
      %p230 = pnand %p228, %p229
      %p231 = pneg %p230
      // Predicated region
      $region37: #{tpu_custom_call.1} parent=5 // pred_check
        _
      $region38: #{tpu_custom_call.1} parent=5 // pred_check_branch
        %233 = sbr.rel (%p230) target = $region40
      $region39: #{tpu_custom_call.1} parent=5 // pred_region
        %s234 = ssub.s32 %s14, 1
        %p235 = scmp.lt.s32.totalorder %s23, 1
        %s236 = scalar_select %p235, %s23, 1
        %s237 = smul.addr %s236, 8
        %s238 = scalar_lea.vmem %s0, %s237
        %p239 = pneg %p52
        %p240 = pneg %p49
        %p241 = scmp.lt.s32.totalorder %s24, 0
        %s242 = scalar_select %p241, %s24, 0
        %s243 = smul.addr %s242, 4
        %s244 = scalar_lea.vmem %s1, %s243
        %p245 = pneg %p78
        %p246 = pneg %p75
        %p247 = scmp.lt.s32.totalorder %s24, 0
        %s248 = scalar_select %p247, %s24, 0
        %s249 = scalar_lea.vmem %s2, %s248
        %p250 = pneg %p104
        %p251 = pneg %p101
        %s252 = smul.u32 16, %s24
        %p253 = scmp.lt.s32.totalorder %s252, 15
        %s254 = scalar_select %p253, %s252, 15
        %s255 = smul.addr %s254, 4
        %s256 = scalar_lea.vmem %s3, %s255
        %p257 = pneg %p130
        %p258 = pneg %p127
        %p259 = pneg %p151
        %p260 = pneg %p148
        %p261 = pneg %p177
        %p262 = pneg %p174
        %s263 = sand.u32 %s164, 1
        %s264 = scalar_lea.sflag [#allocation4], %s263
        %s265 = sand.u32 %s164, 1
        %s266 = smul.addr %s265, 8
        %s267 = scalar_lea.vmem [#allocation3], %s266
        %p268 = scmp.lt.s32.totalorder %s23, 1
        %s269 = scalar_select %p268, %s23, 1
        %s270 = smul.addr %s269, 8
        %s271 = scalar_lea.vmem %s0, %s270
        %p272 = scmp.lt.s32.totalorder %s24, 0
        %s273 = scalar_select %p272, %s24, 0
        %s274 = smul.addr %s273, 4
        %s275 = scalar_lea.vmem %s1, %s274
        %p276 = scmp.lt.s32.totalorder %s24, 0
        %s277 = scalar_select %p276, %s24, 0
        %s278 = scalar_lea.vmem %s2, %s277
        %s279 = smul.u32 16, %s24
        %p280 = scmp.lt.s32.totalorder %s279, 15
        %s281 = scalar_select %p280, %s279, 15
        %s282 = smul.addr %s281, 4
        %s283 = scalar_lea.vmem %s3, %s282
        %s284 = smul.u32 16, %s24
        %p290 = scmp.eq.s32.totalorder %s24, 0
        // Predicated region
        $region41: #{tpu_custom_call.1} parent=39 // pred_check
          %p291 = pneg %p290
        $region42: #{tpu_custom_call.1} parent=39 // pred_check_branch
          %293 = sbr.rel (%p291) target = $region44
        $region43: #{tpu_custom_call.1} parent=39 // pred_region
          %v294 = vld [vmem:[%s271] sm:$0xff]
          %vm295 = vcmask 261120
          %v296 = vsel %vm295, %v294, 0.0
          %297 = vadd.xlane.f32.xlu0 %v296
          %v298 = vpop.xlane.xlu0 %297
          %v299 = vrcp.pop 32.0
          %v300 = vmul.f32 %v298, %v299
          %v301 = vsub.f32 %v294, %v300
          %v302 = vmul.f32 %v301, %v301
          %v303 = vsel %vm295, %v302, 0.0
          %304 = vadd.xlane.f32.xlu0 %v303
          %v305 = vpop.xlane.xlu0 %304
          %v306 = vmul.f32 %v305, %v299
          %v307 = vadd.f32 %v306, 1e-05
          %v308 = vrsqrt.pop %v307
          %v309 = vmul.f32 %v301, %v308
          %v310 = vpack.c.bf16 %v309, %v309
          %vm311 = vcmask 257024
          %312 = vst.msk [vmem:[#allocation2] sm:$0xf] %vm311, %v310
          %v313 = vld [vmem:[%s4] sm:$0x1]
          %v315 = vlaneseq
          %v316 = vshrl.u32 %v315, 7
          %v317 = vsub.s32 0, %v316
          %v318 = vrot.slane %v313, %v317
          %v320 = vadd.f32 %v294, %v318
          %321 = vst.msk [vmem:[%s267] sm:$0xff] %vm295, %v320
        $region44: #{tpu_custom_call.1} parent=39 // pred_fallthru
          _
        %v322 = vld [vmem:[#allocation2] sm:$0xf]
        %v323 = vld [vmem:[%s275] sm:$0xf]
        %v324 = vld [vmem:[%s275 + $0x4] sm:$0xf]
        %v325 = vld [vmem:[%s275 + $0x8] sm:$0xf]
        %v326 = vld [vmem:[%s275 + $0xc] sm:$0xf]
        %v327 = vld [vmem:[%s278] sm:$0x1]
        %v329 = vlaneseq
        %v330 = vshrl.u32 %v329, 7
        %v331 = vsub.s32 0, %v330
        %v332 = vrot.slane %v327, %v331
        %v338 = vunpack.c.l.b16 %v323
        %v339 = vunpack.c.l.b16 %v324
        %v340 = vunpack.c.l.b16 %v325
        %v341 = vunpack.c.l.b16 %v326
        %v342 = vpack.c.b16 %v339, %v338
        %v343 = vpack.c.b16 %v341, %v340
        %vm346 = vcmask 261120
        %v348 = vsel %vm346, %v322, 0
        %350 = vmatprep.subr.bf16.mxu0 0
        %351 = vmatpush1.bf16.msra.mxu0 %v342
        %352 = vmatprep.subr.bf16.mxu0 0
        %353 = vmatpush1.bf16.msra.mxu0 %v343
        %354 = vmatprep.subr.bf16.mxu0 0
        %355 = vmatpush1.bf16.msra.mxu0 0
        %356 = vmatprep.subr.bf16.mxu0 0
        %357 = vmatpush1.bf16.msra.mxu0 0
        %358 = vmatprep.subr.bf16.mxu0 0
        %359 = vmatpush1.bf16.msra.mxu0 0
        %360 = vmatprep.subr.bf16.mxu0 0
        %361 = vmatpush1.bf16.msra.mxu0 0
        %362 = vmatprep.subr.bf16.mxu0 0
        %363 = vmatpush1.bf16.msra.mxu0 0
        %364 = vmatprep.subr.bf16.mxu0 0
        %365 = vmatpush1.bf16.msra.mxu0 0
        %366 = vmatprep.subr.bf16.mxu0 0
        %367 = vmatpush1.bf16.msra.mxu0 0
        %368 = vmatprep.subr.bf16.mxu0 0
        %369 = vmatpush1.bf16.msra.mxu0 0
        %370 = vmatprep.subr.bf16.mxu0 0
        %371 = vmatpush1.bf16.msra.mxu0 0
        %372 = vmatprep.subr.bf16.mxu0 0
        %373 = vmatpush1.bf16.msra.mxu0 0
        %374 = vmatprep.subr.bf16.mxu0 0
        %375 = vmatpush1.bf16.msra.mxu0 0
        %376 = vmatprep.subr.bf16.mxu0 0
        %377 = vmatpush1.bf16.msra.mxu0 0
        %378 = vmatprep.subr.bf16.mxu0 0
        %379 = vmatpush1.bf16.msra.mxu0 0
        %380 = vmatprep.subr.bf16.mxu0 0
        %381 = vmatpush1.bf16.msra.mxu0 0
        %382 = vmatprep.mubr.bf16.mxu0 0
        %383 = vmatmul.mubr.bf16.gmra.mrb[0].mxu0 %v348
        %v384 = vpop.f32.mrb[0].mxu0
        %v385 = vadd.f32 %v332, %v384
        %v386 = vpop.f32.mrb[0].mxu0
        %v387 = vpop.f32.mrb[0].mxu0
        %v388 = vpop.f32.mrb[0].mxu0
        %389 = vdwg.mxu0
        %v390 = vpack.c.bf16 %v385, %v385
        %v391 = vmul.bf16 %v390, 1056980736
        %v392 = vmul.bf16 %v390, 1027030327
        %v393 = vmul.bf16 %v392, %v390
        %v394 = vmul.bf16 %v393, %v390
        %v395 = vadd.bf16 %v390, %v394
        %v396 = vmul.bf16 %v395, 1061961548
        %v397 = vtanh.bf16.pop %v396
        %v398 = vadd.bf16 %v397, 1065369472
        %v399 = vmul.bf16 %v391, %v398
        %v400 = vld [vmem:[%s267] sm:$0xff]
        %v401 = vld [vmem:[%s283] sm:$0xf]
        %v402 = vld [vmem:[%s283 + $0x4] sm:$0xf]
        %v403 = vld [vmem:[%s283 + $0x8] sm:$0xf]
        %v404 = vld [vmem:[%s283 + $0xc] sm:$0xf]
        %v405 = vld [vmem:[%s283 + $0x10] sm:$0xf]
        %v406 = vld [vmem:[%s283 + $0x14] sm:$0xf]
        %v407 = vld [vmem:[%s283 + $0x18] sm:$0xf]
        %v408 = vld [vmem:[%s283 + $0x1c] sm:$0xf]
        %v409 = vld [vmem:[%s283 + $0x20] sm:$0xf]
        %v410 = vld [vmem:[%s283 + $0x24] sm:$0xf]
        %v411 = vld [vmem:[%s283 + $0x28] sm:$0xf]
        %v412 = vld [vmem:[%s283 + $0x2c] sm:$0xf]
        %v413 = vld [vmem:[%s283 + $0x30] sm:$0xf]
        %v414 = vld [vmem:[%s283 + $0x34] sm:$0xf]
        %v415 = vld [vmem:[%s283 + $0x38] sm:$0xf]
        %v416 = vld [vmem:[%s283 + $0x3c] sm:$0xf]
        %v433 = vunpack.c.l.b16 %v401
        %v434 = vunpack.c.l.b16 %v402
        %v435 = vunpack.c.l.b16 %v403
        %v436 = vunpack.c.l.b16 %v404
        %v437 = vunpack.c.l.b16 %v405
        %v438 = vunpack.c.l.b16 %v406
        %v439 = vunpack.c.l.b16 %v407
        %v440 = vunpack.c.l.b16 %v408
        %v441 = vunpack.c.l.b16 %v409
        %v442 = vunpack.c.l.b16 %v410
        %v443 = vunpack.c.l.b16 %v411
        %v444 = vunpack.c.l.b16 %v412
        %v445 = vunpack.c.l.b16 %v413
        %v446 = vunpack.c.l.b16 %v414
        %v447 = vunpack.c.l.b16 %v415
        %v448 = vunpack.c.l.b16 %v416
        %v449 = vpack.c.b16 %v434, %v433
        %v450 = vpack.c.b16 %v436, %v435
        %v451 = vpack.c.b16 %v438, %v437
        %v452 = vpack.c.b16 %v440, %v439
        %v453 = vpack.c.b16 %v442, %v441
        %v454 = vpack.c.b16 %v444, %v443
        %v455 = vpack.c.b16 %v446, %v445
        %v456 = vpack.c.b16 %v448, %v447
        %465 = vmatprep.subr.bf16.mxu0 0
        %466 = vmatpush1.bf16.msra.mxu0 %v449
        %467 = vmatprep.subr.bf16.mxu0 0
        %468 = vmatpush1.bf16.msra.mxu0 %v450
        %469 = vmatprep.subr.bf16.mxu0 0
        %470 = vmatpush1.bf16.msra.mxu0 %v451
        %471 = vmatprep.subr.bf16.mxu0 0
        %472 = vmatpush1.bf16.msra.mxu0 %v452
        %473 = vmatprep.subr.bf16.mxu0 0
        %474 = vmatpush1.bf16.msra.mxu0 %v453
        %475 = vmatprep.subr.bf16.mxu0 0
        %476 = vmatpush1.bf16.msra.mxu0 %v454
        %477 = vmatprep.subr.bf16.mxu0 0
        %478 = vmatpush1.bf16.msra.mxu0 %v455
        %479 = vmatprep.subr.bf16.mxu0 0
        %480 = vmatpush1.bf16.msra.mxu0 %v456
        %481 = vmatprep.subr.bf16.mxu0 0
        %482 = vmatpush1.bf16.msra.mxu0 0
        %483 = vmatprep.subr.bf16.mxu0 0
        %484 = vmatpush1.bf16.msra.mxu0 0
        %485 = vmatprep.subr.bf16.mxu0 0
        %486 = vmatpush1.bf16.msra.mxu0 0
        %487 = vmatprep.subr.bf16.mxu0 0
        %488 = vmatpush1.bf16.msra.mxu0 0
        %489 = vmatprep.subr.bf16.mxu0 0
        %490 = vmatpush1.bf16.msra.mxu0 0
        %491 = vmatprep.subr.bf16.mxu0 0
        %492 = vmatpush1.bf16.msra.mxu0 0
        %493 = vmatprep.subr.bf16.mxu0 0
        %494 = vmatpush1.bf16.msra.mxu0 0
        %495 = vmatprep.subr.bf16.mxu0 0
        %496 = vmatpush1.bf16.msra.mxu0 0
        %497 = vmatprep.mubr.bf16.mxu0 0
        %498 = vmatmul.mubr.bf16.gmra.mrb[0].mxu0 %v399
        %v499 = vpop.f32.mrb[0].mxu0
        %v500 = vadd.f32 0.0, %v499
        %v501 = vpop.f32.mrb[0].mxu0
        %v502 = vpop.f32.mrb[0].mxu0
        %v503 = vpop.f32.mrb[0].mxu0
        %504 = vdwg.mxu0
        %v505 = vadd.f32 %v400, %v500
        %506 = vst.msk [vmem:[%s267] sm:$0xff] %vm346, %v505
        %s507 = sand.u32 %s164, 1
        %s508 = scalar_lea.sflag [#allocation4], %s507
        %s509 = sand.u32 %s164, 1
        %s510 = smul.addr %s509, 8
        %s511 = scalar_lea.vmem [#allocation3], %s510
        // Predicated region
        $region45: #{tpu_custom_call.1} parent=39 // pred_check
          %p512 = pneg %p174
        $region46: #{tpu_custom_call.1} parent=39 // pred_check_branch
          %514 = sbr.rel (%p512) target = $region48
        $region47: #{tpu_custom_call.1} parent=39 // pred_region
          %s516 = ssub.s32 128, 128
          %517 = vsyncadd %s508, %s516
          %s518 = smul.addr %s23, 128
          %s519 = scalar_lea.hbm %s5, %s518
          %s521 = sshll.u32 %s511, 4
          %s522 = int_to_ptr.vmem [resolvable:$true] %s521
          %524 = dma.vmem_to_hbm [thread:$0]  %s522, 128, %s519, %s508
        $region48: #{tpu_custom_call.1} parent=39 // pred_fallthru
          _
      $region40: #{tpu_custom_call.1} parent=5 // pred_fallthru
        _
      %p525 = scmp.le.s32.totalorder 2, %s14
      // Predicated region
      $region49: #{tpu_custom_call.1} parent=5 // pred_check
        %p526 = pneg %p525
      $region50: #{tpu_custom_call.1} parent=5 // pred_check_branch
        %528 = sbr.rel (%p526) target = $region52
      $region51: #{tpu_custom_call.1} parent=5 // pred_region
        %s529 = ssub.s32 %s14, 2
        // Predicated region
        $region53: #{tpu_custom_call.1} parent=51 // pred_check
          %p530 = pneg %p180
        $region54: #{tpu_custom_call.1} parent=51 // pred_check_branch
          %532 = sbr.rel (%p530) target = $region56
        $region55: #{tpu_custom_call.1} parent=51 // pred_region
          %s533 = sand.u32 %s165, 1
          %s534 = scalar_lea.sflag [#allocation4], %s533
          %s535 = sand.u32 %s165, 1
          %s536 = smul.addr %s535, 8
          %s537 = scalar_lea.vmem [#allocation3], %s536
          %538 = dma.done %s534, 128
        $region56: #{tpu_custom_call.1} parent=51 // pred_fallthru
          _
      $region52: #{tpu_custom_call.1} parent=5 // pred_fallthru
        _
    $region6: #{tpu_custom_call.1} parent=1 // loop_footer
      %s18 = sadd.s32 1, %s14
    $region7: #{tpu_custom_call.1} parent=1 // loop_footer_branch
      %13 = sbr.rel target = $region3
    $region8: #{tpu_custom_call.1} parent=1 // loop_exit
      _
    %539 = vsyncpa [#allocation4], 1
    %s540 = scalar_lea.sflag [#allocation4], 1
    %541 = vsyncpa %s540, 1

</llo_original>
